<compile_context>
chip_gen: v6e
topology: v6e:2x2x1
jax: 0.10.0
libtpu: 0.0.40
codegen_flags: <defaults>
</compile_context>

<pallas_src>
import functools

import jax
import jax.numpy as jnp
from jax import lax
from jax.experimental import pallas as pl
from jax.experimental.pallas import tpu as pltpu


# ------------------------------- helpers ------------------------------------

def _round_up(x, m):
    return (x + m - 1) // m * m


def _apply_act(r, act):
    if act == "leaky":
        return jnp.where(r > 0, r, 0.2 * r)   # LeakyReLU(0.2)
    if act == "relu":
        return jnp.maximum(r, 0.0)
    return r


def _pick_tile_m(M, cap=256):
    """Row tile (multiple of 16) and padded M with <= ~1 tile of waste."""
    if M <= cap:
        tm = _round_up(M, 16)
        return tm, tm
    n = -(-M // cap)
    tm = _round_up(-(-M // n), 16)
    return tm, tm * n


def _pick_tile_n(Np, cap):
    """Largest multiple of 128 <= cap that divides Np (Np is 128-aligned)."""
    if Np <= cap:
        return Np
    t = cap // 128 * 128
    while Np % t:
        t -= 128
    return t


def _pick_tile_k(Kp, tm, tn):
    """Single K step whenever the bf16 x+w tiles stay under ~4 MiB."""
    cap = (2 << 20) // (tm + tn)
    cap = max(128, min(8192, cap // 128 * 128))
    if Kp <= cap:
        return Kp
    t = cap
    while Kp % t:
        t -= 128
    return t


# ----------------------------- Pallas kernels -------------------------------

def _matmul_bias_act_kernel(x_ref, w_ref, b_ref, o_ref, *maybe_acc, act, nk):
    """y = act(x @ w + b); bf16 operands, f32 accumulation + epilogue."""
    if nk == 1:
        r = jnp.dot(x_ref[...], w_ref[...],
                    preferred_element_type=jnp.float32) + b_ref[...]
        o_ref[...] = _apply_act(r, act).astype(o_ref.dtype)
        return

    acc_ref = maybe_acc[0]

    @pl.when(pl.program_id(2) == 0)
    def _():
        acc_ref[...] = jnp.zeros_like(acc_ref)

    acc_ref[...] += jnp.dot(x_ref[...], w_ref[...],
                            preferred_element_type=jnp.float32)

    @pl.when(pl.program_id(2) == nk - 1)
    def _():
        r = acc_ref[...] + b_ref[...]
        o_ref[...] = _apply_act(r, act).astype(o_ref.dtype)


def _bn_act_kernel(x_ref, g_ref, b_ref, o_ref, *, act, eps):
    """Single-pass training-mode BatchNorm + activation on a resident block.

    Centered variance (mean of (x-mean)^2) in f32 -> no cancellation issue;
    biased variance (divide by M), matching torch BatchNorm normalization."""
    x = x_ref[...].astype(jnp.float32)
    mean = jnp.mean(x, axis=0, keepdims=True)
    xc = x - mean
    var = jnp.mean(xc * xc, axis=0, keepdims=True)
    scale = g_ref[...] * lax.rsqrt(var + eps)
    o_ref[...] = _apply_act(xc * scale + b_ref[...], act).astype(o_ref.dtype)


# ----------------------------- Pallas wrappers -------------------------------

def pallas_matmul_bias_act(x, w_p, b_p, *, act="none",
                           out_dtype=jnp.bfloat16, n_out=None):
    """y = act(x @ w + b).

    x:   (M, K)  any float (cast to bf16).
    w_p: (Kp, Np) bf16, pre-padded with zeros to 128-multiples.
    b_p: (1, Np)  f32, pre-padded with zeros.
    n_out: true output width (slice back); default Np."""
    M, K = x.shape
    Kp, Np = w_p.shape
    n_out = Np if n_out is None else n_out

    tm, Mp = _pick_tile_m(M, 256)
    n_cap = 1024 if tm <= 32 else 256
    tn = _pick_tile_n(Np, n_cap)
    # Ensure >=2 blocks on a "parallel" axis when possible (v7x: 2 TensorCores).
    if Mp == tm and Np == tn and Np >= 256:
        tn = Np // 2 if (Np // 2) % 128 == 0 else 128
    tk = _pick_tile_k(Kp, tm, tn)
    nk = Kp // tk

    xb = x.astype(jnp.bfloat16)
    if (Mp, Kp) != (M, K):
        xb = jnp.pad(xb, ((0, Mp - M), (0, Kp - K)))

    scratch = [] if nk == 1 else [pltpu.VMEM((tm, tn), jnp.float32)]

    out = pl.pallas_call(
        functools.partial(_matmul_bias_act_kernel, act=act, nk=nk),
        out_shape=jax.ShapeDtypeStruct((Mp, Np), out_dtype),
        grid_spec=pltpu.PrefetchScalarGridSpec(
            num_scalar_prefetch=0,
            grid=(Mp // tm, Np // tn, nk),
            in_specs=[
                pl.BlockSpec((tm, tk), lambda i, j, k: (i, k)),
                pl.BlockSpec((tk, tn), lambda i, j, k: (k, j)),
                pl.BlockSpec((1, tn), lambda i, j, k: (0, j)),
            ],
            out_specs=pl.BlockSpec((tm, tn), lambda i, j, k: (i, j)),
            scratch_shapes=scratch,
        ),
        compiler_params=pltpu.CompilerParams(
            dimension_semantics=("parallel", "parallel", "arbitrary")),
    )(xb, w_p, b_p)

    if (Mp, Np) != (M, n_out):
        out = out[:M, :n_out]
    return out


def pallas_batchnorm_act(x, gamma2d, beta2d, act, eps=1e-5,
                         out_dtype=jnp.bfloat16):
    """Training-mode BatchNorm over rows + activation; whole array resident
    (largest BN tensor in this model is ~0.5 MiB).  x: (M, C)."""
    M, C = x.shape
    return pl.pallas_call(
        functools.partial(_bn_act_kernel, act=act, eps=eps),
        out_shape=jax.ShapeDtypeStruct((M, C), out_dtype),
        grid_spec=pltpu.PrefetchScalarGridSpec(
            num_scalar_prefetch=0,
            grid=(1,),
            in_specs=[
                pl.BlockSpec((M, C), lambda i: (0, 0)),
                pl.BlockSpec((1, C), lambda i: (0, 0)),
                pl.BlockSpec((1, C), lambda i: (0, 0)),
            ],
            out_specs=pl.BlockSpec((M, C), lambda i: (0, 0)),
        ),
        compiler_params=pltpu.CompilerParams(
            dimension_semantics=("arbitrary",)),
    )(x, gamma2d, beta2d)


# -------------------- conv / convT (NHWC rows layout) ------------------------

def conv2d_nhwc(x, w_p, b_p, cout, k, stride, pad, act="none",
                out_dtype=jnp.bfloat16):
    """Conv2d via im2col GEMM.  x: (B,H,W,Cin) NHWC bf16; w_p pre-prepared."""
    # TODO(synk): im2col slab is materialized by XLA; in-kernel patch assembly
    # (tap as a reduction axis reading shifted windows) would cut HBM bytes.
    B, H, W, Cin = x.shape
    OH = (H + 2 * pad - k) // stride + 1
    OW = (W + 2 * pad - k) // stride + 1
    xp = jnp.pad(x, ((0, 0), (pad, pad), (pad, pad), (0, 0))) if pad else x
    cols = [xp[:, ki:ki + stride * (OH - 1) + 1:stride,
               kj:kj + stride * (OW - 1) + 1:stride, :]
            for ki in range(k) for kj in range(k)]
    cols = jnp.concatenate(cols, axis=-1).reshape(B * OH * OW, k * k * Cin)
    y = pallas_matmul_bias_act(cols, w_p, b_p, act=act,
                               out_dtype=out_dtype, n_out=cout)
    return y.reshape(B, OH, OW, cout)


def conv_transpose2d_nhwc(x, w_p, b_p, cout, out_dtype=jnp.bfloat16):
    """ConvTranspose2d(k=4, s=2, p=1) via sub-pixel decomposition (1 GEMM).
    x: (B,H,W,Cin) NHWC bf16.  Returns (B,2H,2W,cout)."""
    B, H, W, Cin = x.shape
    xp = jnp.pad(x, ((0, 0), (1, 1), (1, 1), (0, 0)))        # (B, H+2, W+2, Cin)
    # 2x2 im2col over all (H+1)x(W+1) window positions, stride 1 (no zeros).
    cols = [xp[:, u:u + H + 1, v:v + W + 1, :] for u in range(2) for v in range(2)]
    cols = jnp.concatenate(cols, axis=-1).reshape(B * (H + 1) * (W + 1), 4 * Cin)
    y = pallas_matmul_bias_act(cols, w_p, b_p, out_dtype=out_dtype,
                               n_out=4 * cout)               # (M, 4*cout)
    Y = y.reshape(B, H + 1, W + 1, 2, 2, cout)               # (b, i, j, r, s, co)
    # out[b, 2m+r, 2n+s, co] = Y[b, m+r, n+s, r, s, co]   (shifted depth-to-space)
    rows = []
    for r in range(2):
        rows.append(jnp.stack([Y[:, r:r + H, s:s + W, r, s, :] for s in range(2)],
                              axis=3))                       # (B, H, W, 2, cout)
    out = jnp.stack(rows, axis=2)                            # (B, H, 2, W, 2, cout)
    return out.reshape(B, 2 * H, 2 * W, cout)


def _bn_act_nhwc(x, gb, act):
    B, H, W, C = x.shape
    y = pallas_batchnorm_act(x.reshape(B * H * W, C), gb[0], gb[1], act)
    return y.reshape(B, H, W, C)


# ------------------------ one-time weight preparation ------------------------

def _prep_gemm(w_kn, b_n):
    """(K,N) f32 weight + (N,) bias -> 128-padded bf16 weight + f32 bias row."""
    K, N = w_kn.shape
    Kp, Np = _round_up(K, 128), _round_up(N, 128)
    wp = jnp.zeros((Kp, Np), jnp.bfloat16).at[:K, :N].set(w_kn.astype(jnp.bfloat16))
    bp = jnp.zeros((1, Np), jnp.float32).at[:, :N].set(b_n.astype(jnp.float32))
    return wp, bp


def _conv_w_to_kn(w):
    """torch Conv2d weight (Cout,Cin,k,k) -> im2col matrix (k*k*Cin, Cout)."""
    Cout, Cin, k, _ = w.shape
    return jnp.transpose(w, (2, 3, 1, 0)).reshape(k * k * Cin, Cout)


def _convT_weight_cols(w):
    """Combined sub-pixel weight for ConvTranspose2d(k=4, s=2, p=1).

    w: (Cin, Cout, 4, 4) torch layout.  Returns (4*Cin, 4*Cout): rows ordered
    (u, v, ci) matching the 2x2 im2col, cols ordered (r, s, co) = output parity
    groups; Wc[(u,v,ci),(r,s,co)] = w[ci, co, 3-2u-r, 3-2v-s]."""
    blocks = []
    for u in range(2):
        for v in range(2):
            row = []
            for r in range(2):
                for s in range(2):
                    row.append(w[:, :, 3 - 2 * u - r, 3 - 2 * v - s])
            blocks.append(jnp.concatenate(row, axis=1))      # (Cin, 4*Cout)
    return jnp.concatenate(blocks, axis=0)                   # (4*Cin, 4*Cout)


def prepare_params(params):
    """Pre-cast / pre-transform / pre-pad every GEMM weight once, outside jit."""
    P = {}
    for name in ('e1', 'e2', 'e3', 'e4'):
        P[name] = _prep_gemm(_conv_w_to_kn(params[f'{name}_w']), params[f'{name}_b'])
    P['ml'] = _prep_gemm(
        jnp.concatenate([params['mu_w'].T, params['lv_w'].T], axis=1),
        jnp.concatenate([params['mu_b'], params['lv_b']]))
    P['dfc'] = _prep_gemm(params['dfc_w'].T, params['dfc_b'])
    for name in ('d1', 'd2', 'd3', 'd4'):
        P[name] = _prep_gemm(_convT_weight_cols(params[f'{name}_w']),
                             jnp.tile(params[f'{name}_b'], 4))
    for name in ('bn2', 'bn3', 'dbn1', 'dbn2', 'dbn3'):
        P[name] = (params[f'{name}_g'].reshape(1, -1).astype(jnp.float32),
                   params[f'{name}_b'].reshape(1, -1).astype(jnp.float32))
    return P


# ------------------------------ model forward -------------------------------

def forward(prep, x, y, eps_noise, *, latent_dim, n_channels=64):
    B, c_img, H, W = x.shape
    n_classes = y.shape[1]
    nc = n_channels

    # NCHW -> NHWC once; concat one-hot class planes; single cast to bf16.
    x_nhwc = jnp.transpose(x, (0, 2, 3, 1))
    y_img = jnp.broadcast_to(y[:, None, None, :], (B, H, W, n_classes))
    h = jnp.concatenate([x_nhwc, y_img.astype(x.dtype)],
                        axis=-1).astype(jnp.bfloat16)

    # ---- encoder (bf16 NHWC rows layout throughout) ----
    h = conv2d_nhwc(h, *prep['e1'], nc, 4, 2, 1, act="leaky")
    h = conv2d_nhwc(h, *prep['e2'], nc * 2, 4, 2, 1)
    h = _bn_act_nhwc(h, prep['bn2'], "leaky")
    h = conv2d_nhwc(h, *prep['e3'], nc * 4, 4, 2, 1)
    h = _bn_act_nhwc(h, prep['bn3'], "leaky")
    h = conv2d_nhwc(h, *prep['e4'], nc * 8, 4, 2, 1)          # (B, 4, 4, 512)

    # Flatten must match torch (NCHW) ordering -> tiny transpose of (B,4,4,512).
    flat = jnp.transpose(h, (0, 3, 1, 2)).reshape(B, -1)

    # mu & logvar fused into one GEMM over the shared K=flat_dim sweep (f32 out).
    ml = pallas_matmul_bias_act(flat, *prep['ml'], out_dtype=jnp.float32,
                                n_out=2 * latent_dim)
    mu, logvar = ml[:, :latent_dim], ml[:, latent_dim:]

    # reparameterisation: torch.normal(...).cuda() -> deterministic eps input.
    std = jnp.exp(0.5 * logvar)
    z = eps_noise * std + mu
    zc = jnp.concatenate([z, y], axis=1)

    d = pallas_matmul_bias_act(zc, *prep['dfc'], n_out=nc * 8 * 16)
    d = d.reshape(B, nc * 8, 4, 4).transpose(0, 2, 3, 1)       # NHWC (B,4,4,512)

    # ---- decoder (sub-pixel conv-transpose, bf16 NHWC rows layout) ----
    r = conv_transpose2d_nhwc(d, *prep['d1'], nc * 4)
    r = _bn_act_nhwc(r, prep['dbn1'], "relu")
    r = conv_transpose2d_nhwc(r, *prep['d2'], nc * 2)
    r = _bn_act_nhwc(r, prep['dbn2'], "relu")
    r = conv_transpose2d_nhwc(r, *prep['d3'], nc)
    r = _bn_act_nhwc(r, prep['dbn3'], "relu")
    r = conv_transpose2d_nhwc(r, *prep['d4'], c_img, out_dtype=jnp.float32)

    out = jnp.transpose(r, (0, 3, 1, 2))                       # back to NCHW
    return mu, logvar, out


# --------------------------- deterministic params ---------------------------

def init_params(key, latent_dim, n_in_channels, n_classes):
    nc = 64
    flat_dim = nc * 8 * 4 * 4

    def nk():
        nonlocal key
        key, sub = jax.random.split(key)
        return sub

    def conv_w(cout, cin, k):
        return jax.random.normal(nk(), (cout, cin, k, k), jnp.float32) / jnp.sqrt(cin * k * k)

    def convT_w(cin, cout, k):
        return jax.random.normal(nk(), (cin, cout, k, k), jnp.float32) / jnp.sqrt(cin * k * k)

    def lin_w(out, inp):
        return jax.random.normal(nk(), (out, inp), jnp.float32) / jnp.sqrt(inp)

    def bias(n):
        return 0.01 * jax.random.normal(nk(), (n,), jnp.float32)

    return dict(
        e1_w=conv_w(nc, n_in_channels + n_classes, 4), e1_b=bias(nc),
        e2_w=conv_w(nc * 2, nc, 4), e2_b=bias(nc * 2),
        bn2_g=jnp.ones((nc * 2,), jnp.float32), bn2_b=jnp.zeros((nc * 2,), jnp.float32),
        e3_w=conv_w(nc * 4, nc * 2, 4), e3_b=bias(nc * 4),
        bn3_g=jnp.ones((nc * 4,), jnp.float32), bn3_b=jnp.zeros((nc * 4,), jnp.float32),
        e4_w=conv_w(nc * 8, nc * 4, 4), e4_b=bias(nc * 8),
        mu_w=lin_w(latent_dim, flat_dim), mu_b=bias(latent_dim),
        lv_w=lin_w(latent_dim, flat_dim), lv_b=bias(latent_dim),
        dfc_w=lin_w(flat_dim, latent_dim + n_classes), dfc_b=bias(flat_dim),
        d1_w=convT_w(nc * 8, nc * 4, 4), d1_b=bias(nc * 4),
        dbn1_g=jnp.ones((nc * 4,), jnp.float32), dbn1_b=jnp.zeros((nc * 4,), jnp.float32),
        d2_w=convT_w(nc * 4, nc * 2, 4), d2_b=bias(nc * 2),
        dbn2_g=jnp.ones((nc * 2,), jnp.float32), dbn2_b=jnp.zeros((nc * 2,), jnp.float32),
        d3_w=convT_w(nc * 2, nc, 4), d3_b=bias(nc),
        dbn3_g=jnp.ones((nc,), jnp.float32), dbn3_b=jnp.zeros((nc,), jnp.float32),
        d4_w=convT_w(nc, n_in_channels, 4), d4_b=bias(n_in_channels),
    )


# ------------------------ small correctness checks ---------------------------

def _check_close(got, ref, name, atol=3e-2, rtol=3e-2):
    err = float(jnp.max(jnp.abs(got.astype(jnp.float32) - ref)))
    tol = atol + rtol * float(jnp.max(jnp.abs(ref)))
    assert err <= tol, f"{name}: max err {err} > tol {tol}"


def _unit_test_conv(key):
    B, H, W, Cin, Cout, k, s, p = 2, 8, 8, 5, 7, 4, 2, 1
    k1, k2, k3 = jax.random.split(key, 3)
    x = jax.random.normal(k1, (B, H, W, Cin), jnp.float32)
    w = jax.random.normal(k2, (Cout, Cin, k, k), jnp.float32) * 0.2
    b = jax.random.normal(k3, (Cout,), jnp.float32) * 0.1
    xb = x.astype(jnp.bfloat16).astype(jnp.float32)
    wb = w.astype(jnp.bfloat16).astype(jnp.float32)
    wp, bp = _prep_gemm(_conv_w_to_kn(w), b)
    got = conv2d_nhwc(x.astype(jnp.bfloat16), wp, bp, Cout, k, s, p,
                      act="leaky", out_dtype=jnp.float32)
    ref = lax.conv_general_dilated(
        xb, jnp.transpose(wb, (2, 3, 1, 0)), (s, s), ((p, p), (p, p)),
        dimension_numbers=("NHWC", "HWIO", "NHWC")) + b
    ref = jnp.where(ref > 0, ref, 0.2 * ref)
    _check_close(got, ref, "conv2d")


def _unit_test_convT(key):
    B, H, W, Cin, Cout = 2, 5, 5, 6, 5
    k1, k2, k3 = jax.random.split(key, 3)
    x = jax.random.normal(k1, (B, H, W, Cin), jnp.float32)
    w = jax.random.normal(k2, (Cin, Cout, 4, 4), jnp.float32) * 0.2
    b = jax.random.normal(k3, (Cout,), jnp.float32) * 0.1
    xb = x.astype(jnp.bfloat16).astype(jnp.float32)
    wb = w.astype(jnp.bfloat16).astype(jnp.float32)
    wp, bp = _prep_gemm(_convT_weight_cols(w), jnp.tile(b, 4))
    got = conv_transpose2d_nhwc(x.astype(jnp.bfloat16), wp, bp, Cout,
                                out_dtype=jnp.float32)
    # ConvTranspose2d(4,2,1) == conv with lhs_dilation=2, pad=2, flipped kernel.
    kern = jnp.transpose(wb[:, :, ::-1, ::-1], (2, 3, 0, 1))   # (kh,kw,Cin,Cout)
    ref = lax.conv_general_dilated(
        xb, kern, window_strides=(1, 1), padding=((2, 2), (2, 2)),
        lhs_dilation=(2, 2),
        dimension_numbers=("NHWC", "HWIO", "NHWC")) + b
    _check_close(got, ref, "conv_transpose2d")


# ----------------------------------- main ------------------------------------

if __name__ == "__main__":
    latent_dim, n_in_channels, n_classes = 16, 3, 10
    # spatial MUST be 64: flat_dim = 512*4*4 is hard-coded after 4 stride-2 convs
    B, H, W = 2, 64, 64

    root = jax.random.PRNGKey(0)
    kp, kx, ky, ke, kt1, kt2 = jax.random.split(root, 6)
    params = init_params(kp, latent_dim, n_in_channels, n_classes)
    prep = prepare_params(params)          # one-time bf16 cast / pad, outside jit

    # correctness of the conv / convT lowerings vs lax references
    _unit_test_conv(kt1)
    _unit_test_convT(kt2)

    x = jax.random.normal(kx, (B, n_in_channels, H, W), jnp.float32)
    labels = jax.random.randint(ky, (B,), 0, n_classes)
    y = jax.nn.one_hot(labels, n_classes, dtype=jnp.float32)   # one-hot labels
    eps = jax.random.normal(ke, (B, latent_dim), jnp.float32)  # reparam noise

    fwd = jax.jit(functools.partial(forward, latent_dim=latent_dim))
    mu, logvar, out = fwd(prep, x, y, eps)
    jax.block_until_ready((mu, logvar, out))

    assert mu.shape == (B, latent_dim)
    assert logvar.shape == (B, latent_dim)
    assert out.shape == (B, n_in_channels, H, W)
    assert bool(jnp.all(jnp.isfinite(mu)))
    assert bool(jnp.all(jnp.isfinite(logvar)))
    assert bool(jnp.all(jnp.isfinite(out)))
    print("KERNEL_OK")
</pallas_src>

<mosaic_0001>
module attributes {stable_mosaic.version = 11 : i64} {
  func.func @_matmul_bias_act_kernel(%arg0: i32, %arg1: i32, %arg2: i32, %arg3: memref<32x128xbf16, #tpu.memory_space<vmem>>, %arg4: memref<128x128xbf16, #tpu.memory_space<vmem>>, %arg5: memref<1x128xf32, #tpu.memory_space<vmem>>, %arg6: memref<32x128xf32, #tpu.memory_space<vmem>>) attributes {dimension_semantics = [#tpu.dimension_semantics<parallel>, #tpu.dimension_semantics<parallel>, #tpu.dimension_semantics<arbitrary>], iteration_bounds = array<i64: 1, 1, 1>, scalar_prefetch = 0 : i64, scratch_operands = 0 : i64, tpu.core_type = #tpu.core_type<tc>, window_params = [{transform_indices = @transform_0, window_bounds = array<i64: 32, 128>}, {transform_indices = @transform_1, window_bounds = array<i64: 128, 128>}, {transform_indices = @transform_2, window_bounds = array<i64: 1, 128>}, {transform_indices = @transform_3, window_bounds = array<i64: 32, 128>}]} {
    %c0 = arith.constant 0 : index
    %c0_0 = arith.constant 0 : index
    %0 = vector.load %arg3[%c0, %c0_0] : memref<32x128xbf16, #tpu.memory_space<vmem>>, vector<32x128xbf16>
    %c0_1 = arith.constant 0 : index
    %c0_2 = arith.constant 0 : index
    %1 = vector.load %arg4[%c0_1, %c0_2] : memref<128x128xbf16, #tpu.memory_space<vmem>>, vector<128x128xbf16>
    %cst = arith.constant dense<0.000000e+00> : vector<32x128xf32>
    %2 = tpu.matmul %0, %1, %cst {dimension_numbers = #tpu.dot_dimension_numbers<[1], [0], [0], [1], [0, 0, 1, 1], [], []>} : vector<32x128xbf16>, vector<128x128xbf16>, vector<32x128xf32> -> vector<32x128xf32>
    %c0_3 = arith.constant 0 : index
    %c0_4 = arith.constant 0 : index
    %3 = vector.load %arg5[%c0_3, %c0_4] : memref<1x128xf32, #tpu.memory_space<vmem>>, vector<1x128xf32>
    %4 = vector.broadcast %3 : vector<1x128xf32> to vector<32x128xf32>
    %5 = arith.addf %2, %4 : vector<32x128xf32>
    %cst_5 = arith.constant 0.000000e+00 : f32
    %6 = vector.broadcast %cst_5 : f32 to vector<32x128xf32>
    %7 = arith.cmpf ogt, %5, %6 : vector<32x128xf32>
    %cst_6 = arith.constant 2.000000e-01 : f32
    %8 = vector.broadcast %cst_6 : f32 to vector<32x128xf32>
    %9 = arith.mulf %8, %5 : vector<32x128xf32>
    %10 = arith.select %7, %5, %9 : vector<32x128xi1>, vector<32x128xf32>
    %c0_7 = arith.constant 0 : index
    %c0_8 = arith.constant 0 : index
    %11 = vector.load %arg6[%c0_7, %c0_8] : memref<32x128xf32, #tpu.memory_space<vmem>>, vector<32x128xf32>
    tpu.vector_store %arg6[%c0_7, %c0_8], %10 {strides = array<i32>} : memref<32x128xf32, #tpu.memory_space<vmem>>, vector<32x128xf32>,
    return
  }
  func.func @transform_0(%arg0: i32, %arg1: i32, %arg2: i32) -> (i32, i32) {
    %c0_i32 = arith.constant 0 : i32
    return %arg0, %arg2 : i32, i32
  }
  func.func @transform_1(%arg0: i32, %arg1: i32, %arg2: i32) -> (i32, i32) {
    %c0_i32 = arith.constant 0 : i32
    return %arg2, %arg1 : i32, i32
  }
  func.func @transform_2(%arg0: i32, %arg1: i32, %arg2: i32) -> (i32, i32) {
    %c0_i32 = arith.constant 0 : i32
    %c0_i32_0 = arith.constant 0 : i32
    return %c0_i32, %arg1 : i32, i32
  }
  func.func @transform_3(%arg0: i32, %arg1: i32, %arg2: i32) -> (i32, i32) {
    %c0_i32 = arith.constant 0 : i32
    return %arg0, %arg1 : i32, i32
  }
}

</mosaic_0001>

<llo_original>
// kernel: tpu_custom_call.1
$region0: #{tpu_custom_call.1}
  #allocation0 [shape = 'u32[]', space=smem, size = 0x4, offset = 0x4, fixed_abs, tag = 'smem constant byte address 0x4 - core index']
  #allocation1 [shape = 'u32[144,128]{1,0:T(1,128)}', space=vmem, size = 0x12000, scoped, tag = 'internal scratch']
  %s0 = inlined_call_operand.hbm [shape: bf16[32,128], index: 0, kind: input, shape index: {}]
  %s1 = inlined_call_operand.hbm [shape: bf16[128,128], index: 1, kind: input, shape index: {}]
  %s2 = inlined_call_operand.vmem [shape: f32[1,128], index: 2, kind: input, shape index: {}]
  %s3 = inlined_call_operand.hbm [shape: f32[32,128], index: 3, kind: output, shape index: {}]
  %s4 = sld [smem:[#allocation0]]
  $region30: #{tpu_custom_call.1} parent=0
    _
  %s6 = ssub.s32 1, %s4
  %s7 = scalar_select 0, %s6, %s4
  $region1: #{tpu_custom_call.1} parent=0
    #allocation2 [shape = 'u8[8192]{0}', space=vmem, size = 0x2000, scoped, tag = 'input window, operand 0, single buffered']
    #allocation3 [shape = 's32[1]{0}', space=sflag, size = 0x4, scoped, tag = 'scoped memory for tpu_custom_call.1']
    #allocation4 [shape = 's32[1]{0}', space=sflag, size = 0x4, scoped, tag = 'scoped memory for tpu_custom_call.1']
    #allocation5 [shape = 'u8[32768]{0}', space=vmem, size = 0x8000, scoped, tag = 'input window, operand 1, single buffered']
    #allocation6 [shape = 's32[1]{0}', space=sflag, size = 0x4, scoped, tag = 'scoped memory for tpu_custom_call.1']
    #allocation7 [shape = 'u8[16384]{0}', space=vmem, size = 0x4000, scoped, tag = 'output window, operand 0, single buffered']
    %8 = vsyncpa [#allocation3], 0
    %9 = vsyncpa [#allocation6], 0
    %10 = vsyncpa [#allocation4], 0
    // Predicated region
    $region2: #{tpu_custom_call.1} parent=1 // pred_check
      _
    $region3: #{tpu_custom_call.1} parent=1 // pred_check_branch
      %12 = sbr.rel (0) target = $region5
    $region4: #{tpu_custom_call.1} parent=1 // pred_region
      %s14 = ssub.s32 256, 256
      %15 = vsyncadd [#allocation3], %s14
      %s16 = sshll.u32 [#allocation2], 4
      %s17 = int_to_ptr.vmem [resolvable:$true] %s16
      %22 = dma.hbm_to_vmem [thread:$0]  %s0, 256, %s17, [#allocation3], 64, 64, 4
    $region5: #{tpu_custom_call.1} parent=1 // pred_fallthru
      _
    // Predicated region
    $region6: #{tpu_custom_call.1} parent=1 // pred_check
      _
    $region7: #{tpu_custom_call.1} parent=1 // pred_check_branch
      %24 = sbr.rel (0) target = $region9
    $region8: #{tpu_custom_call.1} parent=1 // pred_region
      %s26 = ssub.s32 1024, 1024
      %27 = vsyncadd [#allocation6], %s26
      %s28 = sshll.u32 [#allocation5], 4
      %s29 = int_to_ptr.vmem [resolvable:$true] %s28
      %34 = dma.hbm_to_vmem [thread:$0]  %s1, 1024, %s29, [#allocation6], 64, 64, 4
    $region9: #{tpu_custom_call.1} parent=1 // pred_fallthru
      _
    // Predicated region
    $region10: #{tpu_custom_call.1} parent=1 // pred_check
      _
    $region11: #{tpu_custom_call.1} parent=1 // pred_check_branch
      %36 = sbr.rel (0) target = $region13
    $region12: #{tpu_custom_call.1} parent=1 // pred_region
      _
    $region13: #{tpu_custom_call.1} parent=1 // pred_fallthru
      _
    // Predicated region
    $region14: #{tpu_custom_call.1} parent=1 // pred_check
      _
    $region15: #{tpu_custom_call.1} parent=1 // pred_check_branch
      %38 = sbr.rel (0) target = $region17
    $region16: #{tpu_custom_call.1} parent=1 // pred_region
      %39 = dma.done [#allocation3], 256
    $region17: #{tpu_custom_call.1} parent=1 // pred_fallthru
      _
    // Predicated region
    $region18: #{tpu_custom_call.1} parent=1 // pred_check
      _
    $region19: #{tpu_custom_call.1} parent=1 // pred_check_branch
      %41 = sbr.rel (0) target = $region21
    $region20: #{tpu_custom_call.1} parent=1 // pred_region
      %42 = dma.done [#allocation6], 1024
    $region21: #{tpu_custom_call.1} parent=1 // pred_fallthru
      _
    %v44 = vld [vmem:[#allocation2] sm:$0xf]
    %v45 = vld [vmem:[#allocation2 + $0x4] sm:$0xf]
    %v46 = vld [vmem:[#allocation2 + $0x8] sm:$0xf]
    %v47 = vld [vmem:[#allocation2 + $0xc] sm:$0xf]
    %v48 = vld [vmem:[#allocation5] sm:$0xf]
    %v49 = vld [vmem:[#allocation5 + $0x4] sm:$0xf]
    %v50 = vld [vmem:[#allocation5 + $0x8] sm:$0xf]
    %v51 = vld [vmem:[#allocation5 + $0xc] sm:$0xf]
    %v52 = vld [vmem:[#allocation5 + $0x10] sm:$0xf]
    %v53 = vld [vmem:[#allocation5 + $0x14] sm:$0xf]
    %v54 = vld [vmem:[#allocation5 + $0x18] sm:$0xf]
    %v55 = vld [vmem:[#allocation5 + $0x1c] sm:$0xf]
    %v56 = vld [vmem:[#allocation5 + $0x20] sm:$0xf]
    %v57 = vld [vmem:[#allocation5 + $0x24] sm:$0xf]
    %v58 = vld [vmem:[#allocation5 + $0x28] sm:$0xf]
    %v59 = vld [vmem:[#allocation5 + $0x2c] sm:$0xf]
    %v60 = vld [vmem:[#allocation5 + $0x30] sm:$0xf]
    %v61 = vld [vmem:[#allocation5 + $0x34] sm:$0xf]
    %v62 = vld [vmem:[#allocation5 + $0x38] sm:$0xf]
    %v63 = vld [vmem:[#allocation5 + $0x3c] sm:$0xf]
    %v64 = vld [vmem:[%s2] sm:$0x1]
    %v66 = vlaneseq
    %v67 = vshrl.u32 %v66, 7
    %v68 = vsub.s32 0, %v67
    %v69 = vrot.slane %v64, %v68
    %v75 = vunpack.c.l.b16 %v44
    %v76 = vunpack.c.l.b16 %v45
    %v77 = vunpack.c.l.b16 %v46
    %v78 = vunpack.c.l.b16 %v47
    %v79 = vpack.c.b16 %v76, %v75
    %v80 = vpack.c.b16 %v78, %v77
    %v99 = vunpack.c.l.b16 %v48
    %v100 = vunpack.c.l.b16 %v49
    %v101 = vunpack.c.l.b16 %v50
    %v102 = vunpack.c.l.b16 %v51
    %v103 = vunpack.c.l.b16 %v52
    %v104 = vunpack.c.l.b16 %v53
    %v105 = vunpack.c.l.b16 %v54
    %v106 = vunpack.c.l.b16 %v55
    %v107 = vunpack.c.l.b16 %v56
    %v108 = vunpack.c.l.b16 %v57
    %v109 = vunpack.c.l.b16 %v58
    %v110 = vunpack.c.l.b16 %v59
    %v111 = vunpack.c.l.b16 %v60
    %v112 = vunpack.c.l.b16 %v61
    %v113 = vunpack.c.l.b16 %v62
    %v114 = vunpack.c.l.b16 %v63
    %v115 = vpack.c.b16 %v100, %v99
    %v116 = vpack.c.b16 %v102, %v101
    %v117 = vpack.c.b16 %v104, %v103
    %v118 = vpack.c.b16 %v106, %v105
    %v119 = vpack.c.b16 %v108, %v107
    %v120 = vpack.c.b16 %v110, %v109
    %v121 = vpack.c.b16 %v112, %v111
    %v122 = vpack.c.b16 %v114, %v113
    %131 = vmatprep.subr.bf16.mxu0 0
    %132 = vmatpush1.bf16.msra.mxu0 %v122
    %133 = vmatprep.subr.bf16.mxu0 0
    %134 = vmatpush1.bf16.msra.mxu0 %v121
    %135 = vmatprep.subr.bf16.mxu0 0
    %136 = vmatpush1.bf16.msra.mxu0 %v120
    %137 = vmatprep.subr.bf16.mxu0 0
    %138 = vmatpush1.bf16.msra.mxu0 %v119
    %139 = vmatprep.subr.bf16.mxu0 0
    %140 = vmatpush1.bf16.msra.mxu0 %v118
    %141 = vmatprep.subr.bf16.mxu0 0
    %142 = vmatpush1.bf16.msra.mxu0 %v117
    %143 = vmatprep.subr.bf16.mxu0 0
    %144 = vmatpush1.bf16.msra.mxu0 %v116
    %145 = vmatprep.subr.bf16.mxu0 0
    %146 = vmatpush1.bf16.msra.mxu0 %v115
    %147 = vmatprep.subr.bf16.mxu0 0
    %148 = vmatpush2.bf16.msra.mxu0 0
    %149 = vmatprep.subr.bf16.mxu0 0
    %150 = vmatpush2.bf16.msra.mxu0 0
    %151 = vmatprep.subr.bf16.mxu0 0
    %152 = vmatpush2.bf16.msra.mxu0 0
    %153 = vmatprep.subr.bf16.mxu0 0
    %154 = vmatpush2.bf16.msra.mxu0 0
    %155 = vmatprep.subr.bf16.mxu0 0
    %156 = vmatpush2.bf16.msra.mxu0 0
    %157 = vmatprep.subr.bf16.mxu0 0
    %158 = vmatpush2.bf16.msra.mxu0 0
    %159 = vmatprep.subr.bf16.mxu0 0
    %160 = vmatpush2.bf16.msra.mxu0 0
    %161 = vmatprep.subr.bf16.mxu0 0
    %162 = vmatpush2.bf16.msra.mxu0 0
    %163 = vmatprep.mubr.bf16.mxu0 0
    %164 = vmatmul.mubr.bf16.gmra.mxu0 %v79
    %v165 = vpop.f32.mrf.mxu0
    %v166 = vadd.f32 %v69, %v165
    %v167 = vpop.f32.mrf.mxu0
    %v168 = vpop.f32.mrf.mxu0
    %v169 = vadd.f32 %v69, %v168
    %v170 = vpop.f32.mrf.mxu0
    %171 = vmatprep.mubr.bf16.mxu0 0
    %172 = vmatmul.mubr.bf16.gmra.mxu0 %v80
    %v173 = vpop.f32.mrf.mxu0
    %v174 = vadd.f32 %v69, %v173
    %v175 = vpop.f32.mrf.mxu0
    %v176 = vpop.f32.mrf.mxu0
    %v177 = vadd.f32 %v69, %v176
    %v178 = vpop.f32.mrf.mxu0
    %179 = vdwg.mxu0
    %vm180 = vcmp.gt.f32.partialorder %v166, 0.0
    %vm181 = vcmp.gt.f32.partialorder %v169, 0.0
    %vm182 = vcmp.gt.f32.partialorder %v174, 0.0
    %vm183 = vcmp.gt.f32.partialorder %v177, 0.0
    %v184 = vmul.f32 %v166, 0.2
    %v185 = vmul.f32 %v169, 0.2
    %v186 = vmul.f32 %v174, 0.2
    %v187 = vmul.f32 %v177, 0.2
    %v188 = vsel %vm180, %v166, %v184
    %v189 = vsel %vm181, %v169, %v185
    %v190 = vsel %vm182, %v174, %v186
    %v191 = vsel %vm183, %v177, %v187
    %192 = vst [vmem:[#allocation7] sm:$0xff] %v188
    %193 = vst [vmem:[#allocation7 + $0x8] sm:$0xff] %v189
    %194 = vst [vmem:[#allocation7 + $0x10] sm:$0xff] %v190
    %195 = vst [vmem:[#allocation7 + $0x18] sm:$0xff] %v191
    // Predicated region
    $region22: #{tpu_custom_call.1} parent=1 // pred_check
      _
    $region23: #{tpu_custom_call.1} parent=1 // pred_check_branch
      %197 = sbr.rel (0) target = $region25
    $region24: #{tpu_custom_call.1} parent=1 // pred_region
      %s199 = ssub.s32 512, 512
      %200 = vsyncadd [#allocation4], %s199
      %s201 = sshll.u32 [#allocation7], 4
      %s202 = int_to_ptr.vmem [resolvable:$true] %s201
      %207 = dma.vmem_to_hbm [thread:$0]  %s202, 512, %s3, [#allocation4], 128, 128, 8
    $region25: #{tpu_custom_call.1} parent=1 // pred_fallthru
      _
    // Predicated region
    $region26: #{tpu_custom_call.1} parent=1 // pred_check
      _
    $region27: #{tpu_custom_call.1} parent=1 // pred_check_branch
      %209 = sbr.rel (0) target = $region29
    $region28: #{tpu_custom_call.1} parent=1 // pred_region
      %210 = dma.done [#allocation4], 512
    $region29: #{tpu_custom_call.1} parent=1 // pred_fallthru
      _
    %211 = vsyncpa [#allocation3], 1
    %212 = vsyncpa [#allocation6], 1
    %213 = vsyncpa [#allocation4], 1

</llo_original>
